<compile_context>
chip_gen: v7x
topology: tpu7x:2x2x1
jax: 0.10.0
libtpu: 0.0.40
codegen_flags: <defaults>
</compile_context>

<pallas_src>
import functools

import jax
import jax.numpy as jnp
from jax.experimental import pallas as pl
from jax.experimental.pallas import tpu as pltpu


def _cdiv(a, b):
    return (a + b - 1) // b


def _round_up(a, b):
    return _cdiv(a, b) * b


def _l_div_kernel(x1_ref, q_ref, gsum_ref, out_ref, *, t_total):
    """Per-block contribution  sum_i gsum[i] * S_i  for this T row-block."""
    x1 = x1_ref[...].astype(jnp.float32)       # (TILE_T, D) row-block of logits
    q = q_ref[...].astype(jnp.float32)         # (1, D)  sum_k softmax(x_target[k])
    gsum = gsum_ref[...].astype(jnp.float32)   # (TILE_T, 1) sum_k gamma[k, i]

    tile_t = x1.shape[0]
    qsum = jnp.sum(q)                          # == K up to rounding (tiny reduce)

    # S_i without materializing logp1:
    #   S_i = sum_d q[d]*x1[i,d] - qsum * logsumexp_d(x1[i,:])
    m1 = jnp.max(x1, axis=-1, keepdims=True)                              # (TILE_T, 1)
    lse = m1 + jnp.log(jnp.sum(jnp.exp(x1 - m1), axis=-1, keepdims=True))  # (TILE_T, 1)
    # NOTE(v7x): if a bundle readout shows the XLU (the per-row lane reduces)
    # as the binding slot, this contraction can move to the idle MXU via
    # lax.dot_general(x1, q, (((1,), (1,)), ((), ()))).
    qx = jnp.sum(x1 * q, axis=-1, keepdims=True)                           # (TILE_T, 1)
    s = qx - qsum * lse                                                    # (TILE_T, 1)

    # Ragged-T mask: the tail block's extra rows hold undefined data (no
    # wrapper-side pad).  jnp.where selects, so garbage/NaN rows cannot leak.
    row0 = pl.program_id(0) * tile_t
    rows = jax.lax.broadcasted_iota(jnp.int32, (tile_t, 1), 0) + row0
    contrib = jnp.sum(jnp.where(rows < t_total, gsum * s, 0.0))

    # Lane-dense (8, 128) partial output -> unmasked vector stores.
    out_ref[...] = jnp.full(out_ref.shape, contrib, out_ref.dtype)


def _choose_tile_t(T, D, x_itemsize, budget_bytes):
    """Pick TILE_T by per-block DMA bytes and a conservative VMEM budget."""

    def vmem_need(t):
        x1_bufs = 2 * t * D * x_itemsize        # double-buffered x1 block
        small = 2 * t * 4 + 2 * D * 4           # gsum block buffers + q
        temps = 4 * t * D * 4                   # in-kernel f32 temporaries
        return x1_bufs + small + temps

    # Target ~1.5 MiB of x1 per block (per-step overhead amortized) instead
    # of a fixed row cap; allow up to 2048 rows when D is small.
    target_block_bytes = 1536 * 1024
    rows = target_block_bytes // max(D * x_itemsize, 1)
    rows = max(8, min(2048, (rows // 8) * 8))
    while rows > 8 and vmem_need(rows) > budget_bytes:
        rows = max(8, ((rows // 2) // 8) * 8)
    if vmem_need(rows) > budget_bytes:
        # TODO(synk): for vocab-scale D add an inner "arbitrary" grid axis over
        # D chunks with online-logsumexp accumulators instead of full-D rows.
        raise ValueError(
            f"L_div Pallas kernel: D={D} too large for a full-D row block "
            f"(needs {vmem_need(rows)} B > VMEM budget {budget_bytes} B)")

    t8 = _round_up(max(T, 1), 8)
    if t8 <= rows:
        # Whole T fits in one block.  Split mid-sized T in two so the
        # "parallel" grid axis can shard across both v7x TensorCores
        # (a no-op on single-core v5e/v6e).
        tile_t = _round_up(_cdiv(t8, 2), 8) if T >= 256 else t8
    else:
        tile_t = rows
        nb = _cdiv(T, tile_t)
        if nb % 2 == 1:  # prefer an even block count (v7x two-core balance)
            alt = _round_up(_cdiv(T, nb + 1), 8)
            if alt >= 8 and vmem_need(alt) <= budget_bytes and _cdiv(T, alt) % 2 == 0:
                tile_t = alt
    return tile_t, vmem_need(tile_t)


def l_div_forward(x1, x_target, gamma):
    """Pallas implementation of L_div(crit='kldiv').forward.

    Args:
      x1:       (T, 1, D) logits of the hypothesis distribution.
      x_target: (K+1, 1, D) logits of the target distribution; last row dropped.
      gamma:    (K, T) alignment weights.
    Returns:
      scalar float32 loss.
    """
    T, _, D = x1.shape
    kp1 = x_target.shape[0]
    K = kp1 - 1
    assert K >= 1, "x_target must have at least 2 rows (last row is dropped)"
    assert gamma.shape == (K, T)

    # Size-1 squeeze is metadata-only.  Hoisted out of the grid loop (tiny
    # O(K*D) / O(K*T) XLA ops): the target softmax reduced over K, and the
    # gamma reduction over K.
    x1_2d = jnp.squeeze(x1, axis=1)                                   # (T, D)
    xt = jnp.squeeze(x_target, axis=1)[:-1].astype(jnp.float32)       # (K, D)
    q = jnp.sum(jax.nn.softmax(xt, axis=-1), axis=0, keepdims=True)   # (1, D)
    gsum = jnp.sum(gamma.astype(jnp.float32), axis=0)[:, None]        # (T, 1)

    budget = 10 * 1024 * 1024   # well under v5e's 16 MiB scoped-VMEM default
    tile_t, need = _choose_tile_t(T, D, jnp.dtype(x1_2d.dtype).itemsize, budget)
    num_blocks = _cdiv(T, tile_t)

    kernel = functools.partial(_l_div_kernel, t_total=T)
    partials = pl.pallas_call(
        kernel,
        out_shape=jax.ShapeDtypeStruct((num_blocks, 8, 128), jnp.float32),
        grid_spec=pltpu.PrefetchScalarGridSpec(
            num_scalar_prefetch=0,
            grid=(num_blocks,),
            in_specs=[
                pl.BlockSpec((tile_t, D), lambda i: (i, 0)),    # x1 row block
                pl.BlockSpec((1, D), lambda i: (0, 0)),         # q (resident, tiny)
                pl.BlockSpec((tile_t, 1), lambda i: (i, 0)),    # gsum block
            ],
            out_specs=pl.BlockSpec((1, 8, 128), lambda i: (i, 0, 0)),
        ),
        compiler_params=pltpu.CompilerParams(
            # "parallel" shards T-blocks across v7x's two TCs; no-op on v5e/v6e.
            dimension_semantics=("parallel",),
            # Derived from actual need (+headroom) instead of a flat 32 MiB.
            vmem_limit_bytes=int(min(32 << 20, max(need + (2 << 20), 4 << 20))),
        ),
    )(x1_2d, q, gsum)

    total = jnp.sum(partials[:, 0, 0])
    return -total / (K * T)


def _l_div_reference(x1, x_target, gamma):
    """Pure-JAX reference mirroring the PyTorch loop semantics."""
    x1_2d = jnp.squeeze(x1, axis=1).astype(jnp.float32)
    xt_2d = jnp.squeeze(x_target[0:-1], axis=1).astype(jnp.float32)
    T = x1_2d.shape[0]
    K = xt_2d.shape[0]
    logp1 = jax.nn.log_softmax(x1_2d, axis=-1)          # (T, D)
    pt = jax.nn.softmax(xt_2d, axis=-1)                 # (K, D)
    s = jnp.einsum("td,kd->t", logp1, pt)               # S_i
    gsum = jnp.sum(gamma.astype(jnp.float32), axis=0)   # (T,)
    return -jnp.sum(gsum * s) / (K * T)


if __name__ == "__main__":
    key = jax.random.PRNGKey(0)
    keys = jax.random.split(key, 9)

    # Case 1: tiny shapes implied by the module (single block, T multiple of 8).
    T, K, D = 8, 6, 32
    x1 = jax.random.normal(keys[0], (T, 1, D), dtype=jnp.float32)
    x_target = jax.random.normal(keys[1], (K + 1, 1, D), dtype=jnp.float32)
    gamma = jax.random.uniform(keys[2], (K, T), dtype=jnp.float32)
    loss = jax.block_until_ready(l_div_forward(x1, x_target, gamma))
    ref = jax.block_until_ready(_l_div_reference(x1, x_target, gamma))
    assert jnp.allclose(loss, ref, rtol=1e-5, atol=1e-5), (loss, ref)

    # Case 2: larger ragged T -> multi-block "parallel" path with an in-kernel
    # masked tail block (no wrapper pad).
    T2, K2, D2 = 600, 12, 256
    x1b = jax.random.normal(keys[3], (T2, 1, D2), dtype=jnp.float32)
    x_targetb = jax.random.normal(keys[4], (K2 + 1, 1, D2), dtype=jnp.float32)
    gammab = jax.random.uniform(keys[5], (K2, T2), dtype=jnp.float32)
    lossb = jax.block_until_ready(l_div_forward(x1b, x_targetb, gammab))
    refb = jax.block_until_ready(_l_div_reference(x1b, x_targetb, gammab))
    assert jnp.allclose(lossb, refb, rtol=2e-4, atol=1e-4), (lossb, refb)

    # Case 3: small ragged T (single block with masked tail rows).
    T3, K3, D3 = 13, 3, 32
    x1c = jax.random.normal(keys[6], (T3, 1, D3), dtype=jnp.float32)
    x_targetc = jax.random.normal(keys[7], (K3 + 1, 1, D3), dtype=jnp.float32)
    gammac = jax.random.uniform(keys[8], (K3, T3), dtype=jnp.float32)
    lossc = jax.block_until_ready(l_div_forward(x1c, x_targetc, gammac))
    refc = jax.block_until_ready(_l_div_reference(x1c, x_targetc, gammac))
    assert jnp.allclose(lossc, refc, rtol=1e-5, atol=1e-5), (lossc, refc)

    print("KERNEL_OK")
</pallas_src>

<mosaic_0001>
module attributes {stable_mosaic.version = 11 : i64} {
  func.func @_l_div_kernel(%arg0: i32, %arg1: memref<8x32xf32, #tpu.memory_space<vmem>>, %arg2: memref<1x32xf32, #tpu.memory_space<vmem>>, %arg3: memref<8x1xf32, #tpu.memory_space<vmem>>, %arg4: memref<1x8x128xf32, #tpu.memory_space<vmem>>) attributes {dimension_semantics = [#tpu.dimension_semantics<parallel>], iteration_bounds = array<i64: 1>, scalar_prefetch = 0 : i64, scratch_operands = 0 : i64, tpu.core_type = #tpu.core_type<tc>, window_params = [{transform_indices = @transform_0, window_bounds = array<i64: 8, 32>}, {pipeline_mode = #tpu.pipeline_mode<synchronous>, transform_indices = @transform_1, window_bounds = array<i64: 1, 32>}, {transform_indices = @transform_2, window_bounds = array<i64: 8, 1>}, {transform_indices = @transform_3, window_bounds = array<i64: 1, 8, 128>}]} {
    %c0 = arith.constant 0 : index
    %c0_0 = arith.constant 0 : index
    %0 = vector.load %arg1[%c0, %c0_0] : memref<8x32xf32, #tpu.memory_space<vmem>>, vector<8x32xf32>
    %c0_1 = arith.constant 0 : index
    %c0_2 = arith.constant 0 : index
    %1 = vector.load %arg2[%c0_1, %c0_2] : memref<1x32xf32, #tpu.memory_space<vmem>>, vector<1x32xf32>
    %c0_3 = arith.constant 0 : index
    %c0_4 = arith.constant 0 : index
    %2 = vector.load %arg3[%c0_3, %c0_4] : memref<8x1xf32, #tpu.memory_space<vmem>>, vector<8x1xf32>
    %3 = vector.shape_cast %1 : vector<1x32xf32> to vector<1x1x32xf32>
    %cst = arith.constant dense<0.000000e+00> : vector<1xf32>
    %4 = vector.multi_reduction <add>, %3, %cst [1, 2] : vector<1x1x32xf32> to vector<1xf32>
    %5 = vector.shape_cast %4 : vector<1xf32> to vector<1x1x1xf32>
    %6 = vector.extract %5[0, 0, 0] : f32 from vector<1x1x1xf32>
    %cst_5 = arith.constant dense<0xFF800000> : vector<8xf32>
    %7 = vector.multi_reduction <maximumf>, %0, %cst_5 [1] : vector<8x32xf32> to vector<8xf32>
    %8 = vector.shape_cast %7 : vector<8xf32> to vector<8x1xf32>
    %9 = vector.broadcast %8 : vector<8x1xf32> to vector<8x32xf32>
    %10 = arith.subf %0, %9 : vector<8x32xf32>
    %11 = math.exp %10 : vector<8x32xf32>
    %cst_6 = arith.constant dense<0.000000e+00> : vector<8xf32>
    %12 = vector.multi_reduction <add>, %11, %cst_6 [1] : vector<8x32xf32> to vector<8xf32>
    %13 = vector.shape_cast %12 : vector<8xf32> to vector<8x1xf32>
    %14 = math.log %13 : vector<8x1xf32>
    %15 = arith.addf %8, %14 : vector<8x1xf32>
    %16 = vector.broadcast %1 : vector<1x32xf32> to vector<8x32xf32>
    %17 = arith.mulf %0, %16 : vector<8x32xf32>
    %cst_7 = arith.constant dense<0.000000e+00> : vector<8xf32>
    %18 = vector.multi_reduction <add>, %17, %cst_7 [1] : vector<8x32xf32> to vector<8xf32>
    %19 = vector.shape_cast %18 : vector<8xf32> to vector<8x1xf32>
    %20 = vector.broadcast %6 : f32 to vector<8x1xf32>
    %21 = arith.mulf %20, %15 : vector<8x1xf32>
    %22 = arith.subf %19, %21 : vector<8x1xf32>
    %c8_i32 = arith.constant 8 : i32
    %23 = arith.muli %arg0, %c8_i32 : i32
    %24 = tpu.iota {dimensions = array<i32: 0>} : vector<8x1xi32>
    %25 = vector.broadcast %23 : i32 to vector<8x1xi32>
    %26 = arith.addi %24, %25 : vector<8x1xi32>
    %c8_i32_8 = arith.constant 8 : i32
    %27 = vector.broadcast %c8_i32_8 : i32 to vector<8x1xi32>
    %28 = arith.cmpi slt, %26, %27 : vector<8x1xi32>
    %29 = arith.mulf %2, %22 : vector<8x1xf32>
    %cst_9 = arith.constant 0.000000e+00 : f32
    %30 = vector.broadcast %cst_9 : f32 to vector<8x1xf32>
    %31 = arith.select %28, %29, %30 : vector<8x1xi1>, vector<8x1xf32>
    %32 = vector.shape_cast %31 : vector<8x1xf32> to vector<1x8x1xf32>
    %cst_10 = arith.constant dense<0.000000e+00> : vector<1xf32>
    %33 = vector.multi_reduction <add>, %32, %cst_10 [1, 2] : vector<1x8x1xf32> to vector<1xf32>
    %34 = vector.shape_cast %33 : vector<1xf32> to vector<1x1x1xf32>
    %35 = vector.extract %34[0, 0, 0] : f32 from vector<1x1x1xf32>
    %36 = vector.broadcast %35 : f32 to vector<1x8x128xf32>
    %c0_11 = arith.constant 0 : index
    %c0_12 = arith.constant 0 : index
    %c0_13 = arith.constant 0 : index
    %37 = vector.load %arg4[%c0_11, %c0_12, %c0_13] : memref<1x8x128xf32, #tpu.memory_space<vmem>>, vector<1x8x128xf32>
    tpu.vector_store %arg4[%c0_11, %c0_12, %c0_13], %36 {strides = array<i32>} : memref<1x8x128xf32, #tpu.memory_space<vmem>>, vector<1x8x128xf32>,
    return
  }
  func.func @transform_0(%arg0: i32) -> (i32, i32) {
    %c0_i32 = arith.constant 0 : i32
    %c0_i32_0 = arith.constant 0 : i32
    return %arg0, %c0_i32 : i32, i32
  }
  func.func @transform_1(%arg0: i32) -> (i32, i32) {
    %c0_i32 = arith.constant 0 : i32
    %c0_i32_0 = arith.constant 0 : i32
    %c0_i32_1 = arith.constant 0 : i32
    return %c0_i32, %c0_i32_0 : i32, i32
  }
  func.func @transform_2(%arg0: i32) -> (i32, i32) {
    %c0_i32 = arith.constant 0 : i32
    %c0_i32_0 = arith.constant 0 : i32
    return %arg0, %c0_i32 : i32, i32
  }
  func.func @transform_3(%arg0: i32) -> (i32, i32, i32) {
    %c0_i32 = arith.constant 0 : i32
    %c0_i32_0 = arith.constant 0 : i32
    %c0_i32_1 = arith.constant 0 : i32
    return %arg0, %c0_i32, %c0_i32_0 : i32, i32, i32
  }
}

</mosaic_0001>

<llo_original>
// kernel: tpu_custom_call.1
$region0: #{tpu_custom_call.1}
  #allocation0 [shape = 'u32[]', space=smem, size = 0x4, offset = 0x4, fixed_abs, tag = 'smem constant byte address 0x4 - core index']
  #allocation1 [shape = 'u32[144,128]{1,0:T(1,128)}', space=vmem, size = 0x12000, scoped, tag = 'internal scratch']
  %s0 = inlined_call_operand.vmem [shape: f32[8,32], index: 0, kind: input, shape index: {}]
  %s1 = inlined_call_operand.vmem [shape: f32[1,32], index: 1, kind: input, shape index: {}]
  %s2 = inlined_call_operand.vmem [shape: f32[8,1], index: 2, kind: input, shape index: {}]
  %s3 = inlined_call_operand.hbm [shape: f32[1,8,128], index: 3, kind: output, shape index: {}]
  %s4 = sld [smem:[#allocation0]]
  $region22: #{tpu_custom_call.1} parent=0
    _
  %s6 = ssub.s32 1, %s4
  %s7 = scalar_select 0, %s6, %s4
  $region1: #{tpu_custom_call.1} parent=0
    #allocation2 [shape = 'u8[4096]{0}', space=vmem, size = 0x1000, scoped, tag = 'output window, operand 0, single buffered']
    #allocation3 [shape = 's32[1]{0}', space=sflag, size = 0x4, scoped, tag = 'scoped memory for tpu_custom_call.1']
    %8 = vsyncpa [#allocation3], 0
    // Predicated region
    $region2: #{tpu_custom_call.1} parent=1 // pred_check
      _
    $region3: #{tpu_custom_call.1} parent=1 // pred_check_branch
      %10 = sbr.rel (0) target = $region5
    $region4: #{tpu_custom_call.1} parent=1 // pred_region
      _
    $region5: #{tpu_custom_call.1} parent=1 // pred_fallthru
      _
    // Predicated region
    $region6: #{tpu_custom_call.1} parent=1 // pred_check
      _
    $region7: #{tpu_custom_call.1} parent=1 // pred_check_branch
      %12 = sbr.rel (0) target = $region9
    $region8: #{tpu_custom_call.1} parent=1 // pred_region
      _
    $region9: #{tpu_custom_call.1} parent=1 // pred_fallthru
      _
    // Predicated region
    $region10: #{tpu_custom_call.1} parent=1 // pred_check
      _
    $region11: #{tpu_custom_call.1} parent=1 // pred_check_branch
      %14 = sbr.rel (0) target = $region13
    $region12: #{tpu_custom_call.1} parent=1 // pred_region
      _
    $region13: #{tpu_custom_call.1} parent=1 // pred_fallthru
      _
    %v15 = vld [vmem:[%s0] sm:$0xff]
    %v16 = vld [vmem:[%s1] sm:$0x1]
    %v17 = vld [vmem:[%s2] sm:$0xff]
    %vm18 = vcmask 253952
    %v19 = vsel %vm18, %v16, 0.0
    %20 = vadd.xlane.f32.xlu0 %v19
    %v21 = vpop.xlane.xlu0 %20
    %v22 = vrot.slane %v21, 4
    %v23 = vadd.f32 %v21, %v22
    %v24 = vrot.slane %v23, 2
    %v25 = vadd.f32 %v23, %v24
    %v26 = vrot.slane %v25, 1
    %v27 = vadd.f32 %v25, %v26
    %s28 = vtos %v27
    %vm29 = vcmask 261120
    %v30 = vsel %vm29, %v15, -inf
    %31 = vmax.xlane.f32.xlu0 %v30
    %v32 = vpop.xlane.xlu0 %31
    %v33 = vsub.f32 %v15, %v32
    %v34 = vmul.f32 %v33, 1.442695
    %v35 = vpow.pop %v34
    %v36 = vsel %vm29, %v35, 0.0
    %37 = vadd.xlane.f32.xlu0 %v36
    %v38 = vpop.xlane.xlu0 %37
    %v39 = vlog2.pop %v38
    %v40 = vmul.f32 %v39, 0.6931472
    %v41 = vadd.f32 %v32, %v40
    %v43 = vlaneseq
    %v44 = vshrl.u32 %v43, 7
    %v45 = vsub.s32 0, %v44
    %v46 = vrot.slane %v16, %v45
    %v48 = vmul.f32 %v15, %v46
    %v49 = vsel %vm29, %v48, 0.0
    %50 = vadd.xlane.f32.xlu0 %v49
    %v51 = vpop.xlane.xlu0 %50
    %v52 = vstv %s28
    %v53 = vmul.f32 %v52, %v41
    %v54 = vsub.f32 %v51, %v53
    %s55 = smul.u32 0, 8
    %v56 = vlaneseq
    %v57 = vshrl.u32 %v56, 7
    %v58 = vstv %s55
    %v59 = vadd.s32 %v57, %v58
    %vm60 = vcmp.lt.s32.totalorder %v59, 8
    %v61 = vmul.f32 %v17, %v54
    %v62 = vsel %vm60, %v61, 0.0
    %vm63 = vcmask 7168
    %v64 = vsel %vm63, %v62, 0.0
    %65 = vadd.xlane.f32.xlu0 %v64
    %v66 = vpop.xlane.xlu0 %65
    %v67 = vrot.slane %v66, 4
    %v68 = vadd.f32 %v66, %v67
    %v69 = vrot.slane %v68, 2
    %v70 = vadd.f32 %v68, %v69
    %v71 = vrot.slane %v70, 1
    %v72 = vadd.f32 %v70, %v71
    %s73 = vtos %v72
    %v74 = vstv %s73
    %75 = vst [vmem:[#allocation2] sm:$0xff] %v74
    // Predicated region
    $region14: #{tpu_custom_call.1} parent=1 // pred_check
      _
    $region15: #{tpu_custom_call.1} parent=1 // pred_check_branch
      %77 = sbr.rel (0) target = $region17
    $region16: #{tpu_custom_call.1} parent=1 // pred_region
      %s79 = ssub.s32 128, 128
      %80 = vsyncadd [#allocation3], %s79
      %s82 = sshll.u32 [#allocation2], 4
      %s83 = int_to_ptr.vmem [resolvable:$true] %s82
      %85 = dma.vmem_to_hbm [thread:$0]  %s83, 128, %s3, [#allocation3]
    $region17: #{tpu_custom_call.1} parent=1 // pred_fallthru
      _
    // Predicated region
    $region18: #{tpu_custom_call.1} parent=1 // pred_check
      _
    $region19: #{tpu_custom_call.1} parent=1 // pred_check_branch
      %87 = sbr.rel (0) target = $region21
    $region20: #{tpu_custom_call.1} parent=1 // pred_region
      %88 = dma.done [#allocation3], 128
    $region21: #{tpu_custom_call.1} parent=1 // pred_fallthru
      _
    %89 = vsyncpa [#allocation3], 1

</llo_original>
